<compile_context>
chip_gen: v5e
topology: v5e:2x2
jax: 0.10.0
libtpu: 0.0.40
codegen_flags: <defaults>
</compile_context>

<pallas_src>
import jax
import jax.numpy as jnp
from jax.experimental import pallas as pl
from jax.experimental.pallas import tpu as pltpu


def _round_up(x, m):
    return ((x + m - 1) // m) * m


def _make_fused_mlp_kernel(num_layers, compute_dtype):
    """Kernel body: chain of (matmul -> bias -> ReLU) entirely in VMEM/vregs."""

    def kernel(x_ref, *rest):
        # rest = (w0, b0, w1, b1, ..., w_{L-1}, b_{L-1}, o_ref)
        o_ref = rest[-1]
        param_refs = rest[:-1]
        y = x_ref[...]
        for l in range(num_layers):
            w = param_refs[2 * l][...]
            b = param_refs[2 * l + 1][...]            # (1, N) row, broadcasts
            if compute_dtype is not None:
                lhs = y.astype(compute_dtype)         # MXU operands (e.g. bf16)
                rhs = w.astype(compute_dtype)
            else:
                lhs, rhs = y, w
            # MXU matmul with f32 accumulation; epilogue (bias + ReLU) in f32.
            y = jnp.dot(lhs, rhs, preferred_element_type=jnp.float32)
            y = jnp.maximum(y + b.astype(jnp.float32), 0.0)
        o_ref[...] = y.astype(o_ref.dtype)

    return kernel


def mlp_layers_forward(x, params, dropout_prob=0.0, *, compute_dtype=None, tm=None):
    """Fused MLPLayers forward: Linear -> ReLU (-> Dropout = identity) per layer.

    Args:
      x: (batch, in_features) activations.
      params: list of (w, b) with w: (in, out), b: (1, out).
      compute_dtype: optional dtype for MXU operands (e.g. jnp.bfloat16);
                     accumulation and epilogue remain f32.
      tm: optional batch-tile override (rounded up to a multiple of 8).
    """
    del dropout_prob  # inference: dropout is identity
    M, K0 = x.shape
    num_layers = len(params)
    feat = [K0] + [w.shape[1] for w, _ in params]
    for (w, b), k_in in zip(params, feat[:-1]):
        assert w.shape[0] == k_in and b.shape == (1, w.shape[1])

    # Batch tiling: multiple of 8 sublanes, as large as useful (<= 512);
    # pad the batch so any M works (padded rows are sliced off at the end).
    if tm is None:
        tm = min(512, _round_up(M, 8))
    tm = max(8, _round_up(tm, 8))
    m_pad = _round_up(M, tm)
    x_p = jnp.pad(x, ((0, m_pad - M), (0, 0))) if m_pad != M else x
    grid = (m_pad // tm,)

    in_specs = [pl.BlockSpec((tm, K0), lambda i: (i, 0))]      # activations tile
    flat_inputs = [x_p]
    for w, b in params:
        kl, nl = w.shape
        in_specs.append(pl.BlockSpec((kl, nl), lambda i: (0, 0)))   # full weight
        in_specs.append(pl.BlockSpec((1, nl), lambda i: (0, 0)))    # bias row
        flat_inputs += [w, b]

    n_out = feat[-1]
    out_specs = pl.BlockSpec((tm, n_out), lambda i: (i, 0))

    flops = sum(2 * m_pad * k * n for k, n in zip(feat[:-1], feat[1:]))
    bytes_accessed = (
        x_p.size * x_p.dtype.itemsize
        + sum(w.size * w.dtype.itemsize + b.size * b.dtype.itemsize
              for w, b in params)
        + m_pad * n_out * jnp.dtype(x.dtype).itemsize)

    out = pl.pallas_call(
        _make_fused_mlp_kernel(num_layers, compute_dtype),
        out_shape=jax.ShapeDtypeStruct((m_pad, n_out), x.dtype),
        grid_spec=pltpu.PrefetchScalarGridSpec(
            num_scalar_prefetch=0,
            grid=grid,
            in_specs=in_specs,
            out_specs=out_specs,
        ),
        compiler_params=pltpu.CompilerParams(
            dimension_semantics=("parallel",)),
        cost_estimate=pl.CostEstimate(
            flops=flops, transcendentals=0, bytes_accessed=bytes_accessed),
    )(*flat_inputs)
    return out[:M] if m_pad != M else out


def init_mlp_params(key, size_list, dtype=jnp.float32):
    """Deterministic xavier-normal-style init; bias pre-shaped to (1, out)."""
    params = []
    for in_size, out_size in zip(size_list[:-1], size_list[1:]):
        key, wk = jax.random.split(key)
        std = (2.0 / (in_size + out_size)) ** 0.5
        w = (jax.random.normal(wk, (in_size, out_size), jnp.float32) * std).astype(dtype)
        b = jnp.zeros((1, out_size), jnp.float32)
        params.append((w, b))
    return params


if __name__ == "__main__":
    key = jax.random.PRNGKey(0)
    size_list = [32, 64, 16]   # MLPLayers(size_list=[32, 64, 16], dropout_prob=0.1)
    batch = 8

    k_in, k_params = jax.random.split(key)
    x = jax.random.normal(k_in, (batch, size_list[0]), jnp.float32)
    params = init_mlp_params(k_params, size_list)

    # Pure-JAX reference.
    ref = x
    for w, b in params:
        ref = jnp.maximum(ref @ w + b, 0.0)

    # f32 path.
    out = mlp_layers_forward(x, params, dropout_prob=0.1)
    out = jax.block_until_ready(out)
    assert out.shape == (batch, size_list[-1])
    assert jnp.allclose(out, ref, atol=1e-5, rtol=1e-5)

    # bf16 MXU path (weights stored bf16, f32 accumulation) — v6e/v7x fast path.
    params_bf16 = [(w.astype(jnp.bfloat16), b) for w, b in params]
    out_bf16 = mlp_layers_forward(x, params_bf16, compute_dtype=jnp.bfloat16)
    out_bf16 = jax.block_until_ready(out_bf16)
    assert out_bf16.shape == (batch, size_list[-1])
    assert jnp.allclose(out_bf16, ref, atol=5e-2, rtol=5e-2)

    # Non-multiple-of-8 batch exercises the padding path (no divisibility assert).
    x_odd = jax.random.normal(jax.random.PRNGKey(1), (5, size_list[0]), jnp.float32)
    ref_odd = x_odd
    for w, b in params:
        ref_odd = jnp.maximum(ref_odd @ w + b, 0.0)
    out_odd = jax.block_until_ready(mlp_layers_forward(x_odd, params))
    assert out_odd.shape == (5, size_list[-1])
    assert jnp.allclose(out_odd, ref_odd, atol=1e-5, rtol=1e-5)

    print("KERNEL_OK")
</pallas_src>

<mosaic_0001>
module attributes {stable_mosaic.version = 11 : i64} {
  func.func @kernel(%arg0: i32, %arg1: memref<8x32xf32, #tpu.memory_space<vmem>>, %arg2: memref<32x64xf32, #tpu.memory_space<vmem>>, %arg3: memref<1x64xf32, #tpu.memory_space<vmem>>, %arg4: memref<64x16xf32, #tpu.memory_space<vmem>>, %arg5: memref<1x16xf32, #tpu.memory_space<vmem>>, %arg6: memref<8x16xf32, #tpu.memory_space<vmem>>) attributes {dimension_semantics = [#tpu.dimension_semantics<parallel>], iteration_bounds = array<i64: 1>, scalar_prefetch = 0 : i64, scratch_operands = 0 : i64, tpu.core_type = #tpu.core_type<tc>, window_params = [{transform_indices = @transform_0, window_bounds = array<i64: 8, 32>}, {pipeline_mode = #tpu.pipeline_mode<synchronous>, transform_indices = @transform_1, window_bounds = array<i64: 32, 64>}, {pipeline_mode = #tpu.pipeline_mode<synchronous>, transform_indices = @transform_2, window_bounds = array<i64: 1, 64>}, {pipeline_mode = #tpu.pipeline_mode<synchronous>, transform_indices = @transform_3, window_bounds = array<i64: 64, 16>}, {pipeline_mode = #tpu.pipeline_mode<synchronous>, transform_indices = @transform_4, window_bounds = array<i64: 1, 16>}, {transform_indices = @transform_5, window_bounds = array<i64: 8, 16>}]} {
    %c0 = arith.constant 0 : index
    %c0_0 = arith.constant 0 : index
    %0 = vector.load %arg1[%c0, %c0_0] : memref<8x32xf32, #tpu.memory_space<vmem>>, vector<8x32xf32>
    %c0_1 = arith.constant 0 : index
    %c0_2 = arith.constant 0 : index
    %1 = vector.load %arg2[%c0_1, %c0_2] : memref<32x64xf32, #tpu.memory_space<vmem>>, vector<32x64xf32>
    %c0_3 = arith.constant 0 : index
    %c0_4 = arith.constant 0 : index
    %2 = vector.load %arg3[%c0_3, %c0_4] : memref<1x64xf32, #tpu.memory_space<vmem>>, vector<1x64xf32>
    %cst = arith.constant dense<0.000000e+00> : vector<8x64xf32>
    %3 = tpu.matmul %0, %1, %cst {dimension_numbers = #tpu.dot_dimension_numbers<[1], [0], [0], [1], [0, 0, 1, 1], [], []>} : vector<8x32xf32>, vector<32x64xf32>, vector<8x64xf32> -> vector<8x64xf32>
    %4 = vector.broadcast %2 : vector<1x64xf32> to vector<8x64xf32>
    %5 = arith.addf %3, %4 : vector<8x64xf32>
    %cst_5 = arith.constant 0.000000e+00 : f32
    %6 = vector.broadcast %cst_5 : f32 to vector<8x64xf32>
    %7 = arith.maximumf %5, %6 : vector<8x64xf32>
    %c0_6 = arith.constant 0 : index
    %c0_7 = arith.constant 0 : index
    %8 = vector.load %arg4[%c0_6, %c0_7] : memref<64x16xf32, #tpu.memory_space<vmem>>, vector<64x16xf32>
    %c0_8 = arith.constant 0 : index
    %c0_9 = arith.constant 0 : index
    %9 = vector.load %arg5[%c0_8, %c0_9] : memref<1x16xf32, #tpu.memory_space<vmem>>, vector<1x16xf32>
    %cst_10 = arith.constant dense<0.000000e+00> : vector<8x16xf32>
    %10 = tpu.matmul %7, %8, %cst_10 {dimension_numbers = #tpu.dot_dimension_numbers<[1], [0], [0], [1], [0, 0, 1, 1], [], []>} : vector<8x64xf32>, vector<64x16xf32>, vector<8x16xf32> -> vector<8x16xf32>
    %11 = vector.broadcast %9 : vector<1x16xf32> to vector<8x16xf32>
    %12 = arith.addf %10, %11 : vector<8x16xf32>
    %cst_11 = arith.constant 0.000000e+00 : f32
    %13 = vector.broadcast %cst_11 : f32 to vector<8x16xf32>
    %14 = arith.maximumf %12, %13 : vector<8x16xf32>
    %c0_12 = arith.constant 0 : index
    %c0_13 = arith.constant 0 : index
    %15 = vector.load %arg6[%c0_12, %c0_13] : memref<8x16xf32, #tpu.memory_space<vmem>>, vector<8x16xf32>
    tpu.vector_store %arg6[%c0_12, %c0_13], %14 {strides = array<i32>} : memref<8x16xf32, #tpu.memory_space<vmem>>, vector<8x16xf32>,
    return
  }
  func.func @transform_0(%arg0: i32) -> (i32, i32) {
    %c0_i32 = arith.constant 0 : i32
    %c0_i32_0 = arith.constant 0 : i32
    return %arg0, %c0_i32 : i32, i32
  }
  func.func @transform_1(%arg0: i32) -> (i32, i32) {
    %c0_i32 = arith.constant 0 : i32
    %c0_i32_0 = arith.constant 0 : i32
    %c0_i32_1 = arith.constant 0 : i32
    return %c0_i32, %c0_i32_0 : i32, i32
  }
  func.func @transform_2(%arg0: i32) -> (i32, i32) {
    %c0_i32 = arith.constant 0 : i32
    %c0_i32_0 = arith.constant 0 : i32
    %c0_i32_1 = arith.constant 0 : i32
    return %c0_i32, %c0_i32_0 : i32, i32
  }
  func.func @transform_3(%arg0: i32) -> (i32, i32) {
    %c0_i32 = arith.constant 0 : i32
    %c0_i32_0 = arith.constant 0 : i32
    %c0_i32_1 = arith.constant 0 : i32
    return %c0_i32, %c0_i32_0 : i32, i32
  }
  func.func @transform_4(%arg0: i32) -> (i32, i32) {
    %c0_i32 = arith.constant 0 : i32
    %c0_i32_0 = arith.constant 0 : i32
    %c0_i32_1 = arith.constant 0 : i32
    return %c0_i32, %c0_i32_0 : i32, i32
  }
  func.func @transform_5(%arg0: i32) -> (i32, i32) {
    %c0_i32 = arith.constant 0 : i32
    %c0_i32_0 = arith.constant 0 : i32
    return %arg0, %c0_i32 : i32, i32
  }
}

</mosaic_0001>

<llo_original>
// kernel: tpu_custom_call.1
$region0: #{tpu_custom_call.1}
  #allocation0 [shape = 'u32[]', space=smem, size = 0x4, offset = 0x4, fixed_abs, tag = 'smem constant byte address 0x4 - core index']
  #allocation1 [shape = 'u32[72,128]{1,0:T(1,128)}', space=vmem, size = 0x9000, scoped, tag = 'internal scratch']
  %s0 = inlined_call_operand.vmem [shape: f32[8,32], index: 0, kind: input, shape index: {}]
  %s1 = inlined_call_operand.vmem [shape: f32[32,64], index: 1, kind: input, shape index: {}]
  %s2 = inlined_call_operand.vmem [shape: f32[1,64], index: 2, kind: input, shape index: {}]
  %s3 = inlined_call_operand.vmem [shape: f32[64,16], index: 3, kind: input, shape index: {}]
  %s4 = inlined_call_operand.vmem [shape: f32[1,16], index: 4, kind: input, shape index: {}]
  %s5 = inlined_call_operand.hbm [shape: f32[8,16], index: 5, kind: output, shape index: {}]
  %s6 = sld [smem:[#allocation0]]
  $region30: #{tpu_custom_call.1} parent=0
    _
  %s8 = ssub.s32 1, %s6
  %s9 = scalar_select 0, %s8, %s6
  $region1: #{tpu_custom_call.1} parent=0
    #allocation2 [shape = 'u8[4096]{0}', space=vmem, size = 0x1000, scoped, tag = 'output window, operand 0, single buffered']
    #allocation3 [shape = 's32[1]{0}', space=sflag, size = 0x4, scoped, tag = 'scoped memory for tpu_custom_call.1']
    %10 = vsyncpa [#allocation3], 0
    // Predicated region
    $region2: #{tpu_custom_call.1} parent=1 // pred_check
      _
    $region3: #{tpu_custom_call.1} parent=1 // pred_check_branch
      %12 = sbr.rel (0) target = $region5
    $region4: #{tpu_custom_call.1} parent=1 // pred_region
      _
    $region5: #{tpu_custom_call.1} parent=1 // pred_fallthru
      _
    // Predicated region
    $region6: #{tpu_custom_call.1} parent=1 // pred_check
      _
    $region7: #{tpu_custom_call.1} parent=1 // pred_check_branch
      %14 = sbr.rel (0) target = $region9
    $region8: #{tpu_custom_call.1} parent=1 // pred_region
      _
    $region9: #{tpu_custom_call.1} parent=1 // pred_fallthru
      _
    // Predicated region
    $region10: #{tpu_custom_call.1} parent=1 // pred_check
      _
    $region11: #{tpu_custom_call.1} parent=1 // pred_check_branch
      %16 = sbr.rel (0) target = $region13
    $region12: #{tpu_custom_call.1} parent=1 // pred_region
      _
    $region13: #{tpu_custom_call.1} parent=1 // pred_fallthru
      _
    // Predicated region
    $region14: #{tpu_custom_call.1} parent=1 // pred_check
      _
    $region15: #{tpu_custom_call.1} parent=1 // pred_check_branch
      %18 = sbr.rel (0) target = $region17
    $region16: #{tpu_custom_call.1} parent=1 // pred_region
      _
    $region17: #{tpu_custom_call.1} parent=1 // pred_fallthru
      _
    // Predicated region
    $region18: #{tpu_custom_call.1} parent=1 // pred_check
      _
    $region19: #{tpu_custom_call.1} parent=1 // pred_check_branch
      %20 = sbr.rel (0) target = $region21
    $region20: #{tpu_custom_call.1} parent=1 // pred_region
      _
    $region21: #{tpu_custom_call.1} parent=1 // pred_fallthru
      _
    %v21 = vld [vmem:[%s0] sm:$0xff]
    %v22 = vld [vmem:[%s1] sm:$0xff]
    %v23 = vld [vmem:[%s1 + $0x8] sm:$0xff]
    %v24 = vld [vmem:[%s1 + $0x10] sm:$0xff]
    %v25 = vld [vmem:[%s1 + $0x18] sm:$0xff]
    %v26 = vld [vmem:[%s2] sm:$0x1]
    %v28 = vperm.slane %v26, 0
    %vm30 = vcmask 261120
    %v32 = vsel %vm30, %v21, 0
    %34 = vmatpush.msra.mxu0 0.0
    %35 = vmatpush.msra.mxu0 0.0
    %36 = vmatpush.msra.mxu0 0.0
    %37 = vmatpush.msra.mxu0 0.0
    %38 = vmatpush.msra.mxu0 0.0
    %39 = vmatpush.msra.mxu0 0.0
    %40 = vmatpush.msra.mxu0 0.0
    %41 = vmatpush.msra.mxu0 0.0
    %42 = vmatpush.msra.mxu0 0.0
    %43 = vmatpush.msra.mxu0 0.0
    %44 = vmatpush.msra.mxu0 0.0
    %45 = vmatpush.msra.mxu0 0.0
    %46 = vmatpush.msra.mxu0 %v25
    %47 = vmatpush.msra.mxu0 %v24
    %48 = vmatpush.msra.mxu0 %v23
    %49 = vmatpush.msra.mxu0 %v22
    %50 = vmatmul.f32.gmra.mxu0 %v32
    %v51 = vpop.f32.mrf.mxu0
    %v52 = vadd.f32 %v28, %v51
    %53 = vdwg.mxu0
    %v54 = vmax.f32 %v52, 0.0
    %v55 = vld [vmem:[%s3] sm:$0xff]
    %v56 = vld [vmem:[%s3 + $0x8] sm:$0xff]
    %v57 = vld [vmem:[%s3 + $0x10] sm:$0xff]
    %v58 = vld [vmem:[%s3 + $0x18] sm:$0xff]
    %v59 = vld [vmem:[%s3 + $0x20] sm:$0xff]
    %v60 = vld [vmem:[%s3 + $0x28] sm:$0xff]
    %v61 = vld [vmem:[%s3 + $0x30] sm:$0xff]
    %v62 = vld [vmem:[%s3 + $0x38] sm:$0xff]
    %v63 = vld [vmem:[%s4] sm:$0x1]
    %v65 = vperm.slane %v63, 0
    %vm67 = vcmask 523264
    %v69 = vsel %vm67, %v54, 0
    %71 = vmatpush.msra.mxu0 0.0
    %72 = vmatpush.msra.mxu0 0.0
    %73 = vmatpush.msra.mxu0 0.0
    %74 = vmatpush.msra.mxu0 0.0
    %75 = vmatpush.msra.mxu0 0.0
    %76 = vmatpush.msra.mxu0 0.0
    %77 = vmatpush.msra.mxu0 0.0
    %78 = vmatpush.msra.mxu0 0.0
    %79 = vmatpush.msra.mxu0 %v62
    %80 = vmatpush.msra.mxu0 %v61
    %81 = vmatpush.msra.mxu0 %v60
    %82 = vmatpush.msra.mxu0 %v59
    %83 = vmatpush.msra.mxu0 %v58
    %84 = vmatpush.msra.mxu0 %v57
    %85 = vmatpush.msra.mxu0 %v56
    %86 = vmatpush.msra.mxu0 %v55
    %87 = vmatmul.f32.gmra.mxu0 %v69
    %v88 = vpop.f32.mrf.mxu0
    %v89 = vadd.f32 %v65, %v88
    %90 = vdwg.mxu0
    %v91 = vmax.f32 %v89, 0.0
    %vm92 = vcmask 130048
    %93 = vst.msk [vmem:[#allocation2] sm:$0xff] %vm92, %v91
    // Predicated region
    $region22: #{tpu_custom_call.1} parent=1 // pred_check
      _
    $region23: #{tpu_custom_call.1} parent=1 // pred_check_branch
      %95 = sbr.rel (0) target = $region25
    $region24: #{tpu_custom_call.1} parent=1 // pred_region
      %97 = vsyncadd [#allocation3], 0
      %s99 = sshll.u32 [#allocation2], 4
      %s100 = int_to_ptr.vmem [resolvable:$true] %s99
      %s101 = sshll.u32 %s5, 4
      %s102 = int_to_ptr.hbm [resolvable:$true] %s101
      %104 = dma.vmem_to_hbm [thread:$0]  %s100, 128, %s102, [#allocation3]
    $region25: #{tpu_custom_call.1} parent=1 // pred_fallthru
      _
    // Predicated region
    $region26: #{tpu_custom_call.1} parent=1 // pred_check
      _
    $region27: #{tpu_custom_call.1} parent=1 // pred_check_branch
      %106 = sbr.rel (0) target = $region29
    $region28: #{tpu_custom_call.1} parent=1 // pred_region
      %108 = dma.done [#allocation3], 128
    $region29: #{tpu_custom_call.1} parent=1 // pred_fallthru
      _
    %109 = vsyncpa [#allocation3], 1

</llo_original>
